<compile_context>
chip_gen: v6e
topology: v6e:2x2x1
jax: 0.10.0
libtpu: 0.0.40
codegen_flags: <defaults>
</compile_context>

<pallas_src>
import functools

import jax
import jax.numpy as jnp
from jax import lax
from jax.experimental import pallas as pl
from jax.experimental.pallas import tpu as pltpu


def _clip_loss_tile_kernel(scale_ref, q_ref, gt_ref, gdiag_ref, *rest,
                           masked, mm_dtype):
    """One query-row tile: logits stripe, row-LSE, diag, per-column partials."""
    if masked:
        (row_bias_ref, col_bias_ref,
         lse_ref, diag_ref, cmax_ref, csum_ref) = rest
    else:
        lse_ref, diag_ref, cmax_ref, csum_ref = rest

    scale = scale_ref[0, 0]

    # L2-normalize the query tile in f32 and fold in logit_scale here
    # (TQxDp multiply instead of a TQxBp one on the logits stripe).
    x = q_ref[...].astype(jnp.float32)
    ss = jnp.sum(x * x, axis=-1, keepdims=True)
    inv = lax.rsqrt(jnp.maximum(ss, 1e-24)) * scale            # EUP rsqrt
    qs = x * inv                                               # scale * normalized q
    qs_m = qs.astype(mm_dtype)

    # Logits stripe: (scale*qn) @ gT.  Gallery is pre-normalized / pre-cast /
    # pre-transposed to [Dp, Bp] in the wrapper -> plain MXU matmul, f32 acc.
    logits = lax.dot_general(
        qs_m, gt_ref[...],
        dimension_numbers=(((1,), (0,)), ((), ())),
        preferred_element_type=jnp.float32)                    # [TQ, Bp]

    if masked:
        # Additive -1e30 biases for padded rows / columns (built in the
        # wrapper; no closed-over array constants inside the kernel).
        logits = logits + row_bias_ref[...] + col_bias_ref[...]

    # Correct-pair (diagonal) logits: the matching gallery rows arrive through
    # their own row-tiled BlockSpec -> O(TQ*Dp), single cast.
    diag = jnp.sum(qs * gdiag_ref[...].astype(jnp.float32),
                   axis=-1, keepdims=True)                     # [TQ, 1]

    # Query-direction log-sum-exp (per-row shift).
    m_row = jnp.max(logits, axis=-1, keepdims=True)            # [TQ, 1]
    e_row = jnp.exp(logits - m_row)
    lse_ref[...] = m_row + jnp.log(jnp.sum(e_row, axis=-1, keepdims=True))
    diag_ref[...] = diag

    # Gallery-direction partials with per-COLUMN shift (robust at any
    # logit_scale); combined across tiles by a true per-column LSE epilogue.
    m_col = jnp.max(logits, axis=0, keepdims=True)             # [1, Bp]
    s_col = jnp.sum(jnp.exp(logits - m_col), axis=0, keepdims=True)
    cmax_ref[...] = m_col.reshape(1, 1, m_col.shape[-1])
    csum_ref[...] = s_col.reshape(1, 1, s_col.shape[-1])


def _round_up(x, m):
    return ((x + m - 1) // m) * m


@functools.partial(jax.jit, static_argnames=("block_q", "use_bf16_matmul"))
def clip_loss(query_features, gallery_features, logit_scale,
              *, block_q=256, use_bf16_matmul=True):
    """Pallas TPU ClipLoss.forward (CrossEntropyLoss, mean reduction).

    block_q: query rows per grid step (multiple of 128).  256 is a good
    default; 512 also fits on v5e/v6e (128 MiB VMEM) for moderate B*D.
    On v7x prefer an even number of row tiles so both TensorCores get equal
    work under the "parallel" grid axis.
    """
    B, D = query_features.shape
    assert gallery_features.shape == (B, D)
    assert block_q % 128 == 0, "block_q must be a multiple of 128 (lane width)"

    tq = block_q
    bp = _round_up(B, tq)       # padded batch (query rows and logit columns)
    dp = _round_up(D, 128)      # padded feature dim (lanes)
    nt = bp // tq               # number of row tiles
    masked = bp != B            # each tile still has >=1 valid row (bp - B < tq)

    mm_dtype = jnp.bfloat16 if use_bf16_matmul else jnp.float32

    # ---- hoisted, loop-invariant gallery preprocessing (runs once in XLA) ----
    g32 = gallery_features.astype(jnp.float32)
    gnorm = lax.rsqrt(jnp.maximum(jnp.sum(g32 * g32, axis=-1, keepdims=True), 1e-24))
    gn = (g32 * gnorm).astype(mm_dtype)                        # [B, D] normalized
    if (bp, dp) != (B, D):
        gn = jnp.pad(gn, ((0, bp - B), (0, dp - D)))           # padded rows stay zero
    gt = gn.T                                                  # [Dp, Bp] MXU-friendly RHS

    q = query_features
    if (bp, dp) != (B, D):
        q = jnp.pad(q, ((0, bp - B), (0, dp - D)))

    scale = jnp.asarray(logit_scale, dtype=jnp.float32).reshape(1, 1)

    inputs = [scale, q, gt, gn]
    in_specs = [
        pl.BlockSpec(memory_space=pltpu.MemorySpace.SMEM),     # logit_scale
        pl.BlockSpec((tq, dp), lambda i: (i, 0)),              # query row tile
        # Resident gallery: constant index_map -> Pallas DMAs it only once.
        # (pipeline_mode=pl.Buffered(1) would also drop the second buffer, but
        # support varies across jax versions; we only account for 2x below.)
        pl.BlockSpec((dp, bp), lambda i: (0, 0)),
        pl.BlockSpec((tq, dp), lambda i: (i, 0)),              # diagonal gallery rows
    ]
    if masked:
        ids = jnp.arange(bp, dtype=jnp.int32)
        bias = jnp.where(ids < B, 0.0, -1e30).astype(jnp.float32)
        inputs += [bias.reshape(bp, 1), bias.reshape(1, bp)]
        in_specs += [pl.BlockSpec((tq, 1), lambda i: (i, 0)),  # row bias tile
                     pl.BlockSpec((1, bp), lambda i: (0, 0))]  # column bias

    # ---- generation-aware VMEM budget (v5e/v6e: 128 MiB, v7x: 64 MiB) -------
    mm_bytes = jnp.dtype(mm_dtype).itemsize
    in_bytes = q.dtype.itemsize
    est = (2 * tq * dp * in_bytes          # query tile (double buffered)
           + 2 * dp * bp * mm_bytes        # resident gallery (2 buffers reserved)
           + 2 * tq * dp * mm_bytes        # diagonal gallery tile (double buffered)
           + 6 * tq * bp * 4               # logits / exp / reduce temporaries
           + 4 * tq * dp * 4)              # normalized / scaled query temporaries
    try:
        cap = int(getattr(pltpu.get_tpu_info(), "vmem_capacity_bytes",
                          64 * 1024 * 1024))
    except Exception:
        cap = 64 * 1024 * 1024
    vmem_limit = int(min(max(est, 32 * 1024 * 1024), int(0.87 * cap)))
    # TODO(synk): for very large B*D (e.g. B>=8k, D>=512 on v7x's 64 MiB VMEM)
    # add a gallery-column grid axis ("arbitrary") with flash-style online
    # row-LSE accumulators so the resident gallery / TQxB stripe stay bounded.

    kernel = functools.partial(_clip_loss_tile_kernel,
                               masked=masked, mm_dtype=mm_dtype)

    row_lse, row_diag, col_max, col_sum = pl.pallas_call(
        kernel,
        grid=(nt,),
        in_specs=in_specs,
        out_specs=[
            pl.BlockSpec((tq, 1), lambda i: (i, 0)),           # per-row lse
            pl.BlockSpec((tq, 1), lambda i: (i, 0)),           # per-row diag
            pl.BlockSpec((1, 1, bp), lambda i: (i, 0, 0)),     # per-tile column max
            pl.BlockSpec((1, 1, bp), lambda i: (i, 0, 0)),     # per-tile column sums
        ],
        out_shape=[
            jax.ShapeDtypeStruct((bp, 1), jnp.float32),
            jax.ShapeDtypeStruct((bp, 1), jnp.float32),
            jax.ShapeDtypeStruct((nt, 1, bp), jnp.float32),
            jax.ShapeDtypeStruct((nt, 1, bp), jnp.float32),
        ],
        compiler_params=pltpu.CompilerParams(
            dimension_semantics=("parallel",),   # row tiles independent -> megacore
            vmem_limit_bytes=vmem_limit),
    )(*inputs)

    # ---- tiny O(nt*B) epilogue: true per-column LSE combine + averages ------
    lse_row = row_lse[:B, 0]
    diag = row_diag[:B, 0]
    m_col = col_max[:, 0, :B]                                  # (nt, B)
    s_col = col_sum[:, 0, :B]                                  # (nt, B)
    m_star = jnp.max(m_col, axis=0)                            # (B,) true column max
    s_tot = jnp.sum(s_col * jnp.exp(m_col - m_star[None, :]), axis=0)
    lse_col = m_star + jnp.log(s_tot)
    ce_q = jnp.mean(lse_row - diag)                            # CE(logits_per_query)
    ce_g = jnp.mean(lse_col - diag)                            # CE(logits_per_gallery)
    return 0.5 * (ce_q + ce_g)


def _reference_clip_loss(q, g, scale):
    """Pure-JAX (f32) reference matching the PyTorch module."""
    qn = q / jnp.maximum(jnp.linalg.norm(q, axis=-1, keepdims=True), 1e-12)
    gn = g / jnp.maximum(jnp.linalg.norm(g, axis=-1, keepdims=True), 1e-12)
    logits = scale * qn @ gn.T
    labels = jnp.arange(logits.shape[0])

    def ce(lg):
        lse = jax.nn.logsumexp(lg, axis=-1)
        return jnp.mean(lse - lg[jnp.arange(lg.shape[0]), labels])

    return 0.5 * (ce(logits) + ce(logits.T))


if __name__ == "__main__":
    key = jax.random.PRNGKey(0)
    k1, k2, k3, k4 = jax.random.split(key, 4)
    init_scale = jnp.float32(1.0 / 0.07)   # CLIP init exp(log(1/0.07))

    # Case 1: lane/sublane-aligned shapes, 2 row tiles (exercises the grid).
    B1, D1 = 256, 128
    q1 = jax.random.normal(k1, (B1, D1), dtype=jnp.float32)
    g1 = jax.random.normal(k2, (B1, D1), dtype=jnp.float32)
    loss1 = clip_loss(q1, g1, init_scale, block_q=128)
    jax.block_until_ready(loss1)
    ref1 = _reference_clip_loss(q1, g1, init_scale)
    assert jnp.isfinite(loss1), loss1
    assert jnp.allclose(loss1, ref1, rtol=2e-2, atol=2e-2), (loss1, ref1)

    # Case 2: ragged shapes (exercises padding + bias-mask path).
    B2, D2 = 200, 96
    q2 = jax.random.normal(k3, (B2, D2), dtype=jnp.float32)
    g2 = jax.random.normal(k4, (B2, D2), dtype=jnp.float32)
    loss2 = clip_loss(q2, g2, init_scale, block_q=128)
    jax.block_until_ready(loss2)
    ref2 = _reference_clip_loss(q2, g2, init_scale)
    assert jnp.isfinite(loss2), loss2
    assert jnp.allclose(loss2, ref2, rtol=2e-2, atol=2e-2), (loss2, ref2)

    # Case 3: large (clamped) logit_scale -> exercises per-column LSE robustness.
    big_scale = jnp.float32(100.0)
    loss3 = clip_loss(q2, g2, big_scale, block_q=128)
    jax.block_until_ready(loss3)
    ref3 = _reference_clip_loss(q2, g2, big_scale)
    assert jnp.isfinite(loss3), loss3
    assert jnp.allclose(loss3, ref3, rtol=2e-2, atol=2e-2), (loss3, ref3)

    print("KERNEL_OK")
</pallas_src>

<mosaic_0001>
module attributes {stable_mosaic.version = 11 : i64} {
  func.func @_clip_loss_tile_kernel(%arg0: i32, %arg1: memref<1x1xf32, #tpu.memory_space<smem>>, %arg2: memref<128x128xf32, #tpu.memory_space<vmem>>, %arg3: memref<128x256xbf16, #tpu.memory_space<vmem>>, %arg4: memref<128x128xbf16, #tpu.memory_space<vmem>>, %arg5: memref<128x1xf32, #tpu.memory_space<vmem>>, %arg6: memref<128x1xf32, #tpu.memory_space<vmem>>, %arg7: memref<1x1x256xf32, #tpu.memory_space<vmem>>, %arg8: memref<1x1x256xf32, #tpu.memory_space<vmem>>) attributes {dimension_semantics = [#tpu.dimension_semantics<parallel>], iteration_bounds = array<i64: 2>, scalar_prefetch = 0 : i64, scratch_operands = 0 : i64, tpu.core_type = #tpu.core_type<tc>, window_params = [{transform_indices = @transform_0, window_bounds = array<i64: 1, 1>}, {transform_indices = @transform_1, window_bounds = array<i64: 128, 128>}, {pipeline_mode = #tpu.pipeline_mode<synchronous>, transform_indices = @transform_2, window_bounds = array<i64: 128, 256>}, {transform_indices = @transform_3, window_bounds = array<i64: 128, 128>}, {transform_indices = @transform_4, window_bounds = array<i64: 128, 1>}, {transform_indices = @transform_5, window_bounds = array<i64: 128, 1>}, {transform_indices = @transform_6, window_bounds = array<i64: 1, 1, 256>}, {transform_indices = @transform_7, window_bounds = array<i64: 1, 1, 256>}]} {
    %c0 = arith.constant 0 : index
    %c0_0 = arith.constant 0 : index
    %0 = memref.load %arg1[%c0, %c0_0] : memref<1x1xf32, #tpu.memory_space<smem>>
    %c0_1 = arith.constant 0 : index
    %c0_2 = arith.constant 0 : index
    %1 = vector.load %arg2[%c0_1, %c0_2] : memref<128x128xf32, #tpu.memory_space<vmem>>, vector<128x128xf32>
    %2 = arith.mulf %1, %1 : vector<128x128xf32>
    %cst = arith.constant dense<0.000000e+00> : vector<128xf32>
    %3 = vector.multi_reduction <add>, %2, %cst [1] : vector<128x128xf32> to vector<128xf32>
    %4 = vector.shape_cast %3 : vector<128xf32> to vector<128x1xf32>
    %cst_3 = arith.constant 1.000000e-24 : f32
    %5 = vector.broadcast %cst_3 : f32 to vector<128x1xf32>
    %6 = arith.maximumf %4, %5 : vector<128x1xf32>
    %7 = math.rsqrt %6 : vector<128x1xf32>
    %8 = vector.broadcast %0 : f32 to vector<128x1xf32>
    %9 = arith.mulf %7, %8 : vector<128x1xf32>
    %10 = vector.broadcast %9 : vector<128x1xf32> to vector<128x128xf32>
    %11 = arith.mulf %1, %10 : vector<128x128xf32>
    %12 = arith.truncf %11 : vector<128x128xf32> to vector<128x128xbf16>
    %c0_4 = arith.constant 0 : index
    %c0_5 = arith.constant 0 : index
    %13 = vector.load %arg3[%c0_4, %c0_5] : memref<128x256xbf16, #tpu.memory_space<vmem>>, vector<128x256xbf16>
    %cst_6 = arith.constant dense<0.000000e+00> : vector<128x256xf32>
    %14 = tpu.matmul %12, %13, %cst_6 {dimension_numbers = #tpu.dot_dimension_numbers<[1], [0], [0], [1], [0, 0, 1, 1], [], []>} : vector<128x128xbf16>, vector<128x256xbf16>, vector<128x256xf32> -> vector<128x256xf32>
    %c0_7 = arith.constant 0 : index
    %c0_8 = arith.constant 0 : index
    %15 = vector.load %arg4[%c0_7, %c0_8] : memref<128x128xbf16, #tpu.memory_space<vmem>>, vector<128x128xbf16>
    %16 = arith.extf %15 : vector<128x128xbf16> to vector<128x128xf32>
    %17 = arith.mulf %11, %16 : vector<128x128xf32>
    %cst_9 = arith.constant dense<0.000000e+00> : vector<128xf32>
    %18 = vector.multi_reduction <add>, %17, %cst_9 [1] : vector<128x128xf32> to vector<128xf32>
    %19 = vector.shape_cast %18 : vector<128xf32> to vector<128x1xf32>
    %cst_10 = arith.constant dense<0xFF800000> : vector<128xf32>
    %20 = vector.multi_reduction <maximumf>, %14, %cst_10 [1] : vector<128x256xf32> to vector<128xf32>
    %21 = vector.shape_cast %20 : vector<128xf32> to vector<128x1xf32>
    %22 = vector.broadcast %21 : vector<128x1xf32> to vector<128x256xf32>
    %23 = arith.subf %14, %22 : vector<128x256xf32>
    %24 = math.exp %23 : vector<128x256xf32>
    %cst_11 = arith.constant dense<0.000000e+00> : vector<128xf32>
    %25 = vector.multi_reduction <add>, %24, %cst_11 [1] : vector<128x256xf32> to vector<128xf32>
    %26 = vector.shape_cast %25 : vector<128xf32> to vector<128x1xf32>
    %27 = math.log %26 : vector<128x1xf32>
    %28 = arith.addf %21, %27 : vector<128x1xf32>
    %c0_12 = arith.constant 0 : index
    %c0_13 = arith.constant 0 : index
    %29 = vector.load %arg5[%c0_12, %c0_13] : memref<128x1xf32, #tpu.memory_space<vmem>>, vector<128x1xf32>
    tpu.vector_store %arg5[%c0_12, %c0_13], %28 {strides = array<i32>} : memref<128x1xf32, #tpu.memory_space<vmem>>, vector<128x1xf32>,
    %c0_14 = arith.constant 0 : index
    %c0_15 = arith.constant 0 : index
    %30 = vector.load %arg6[%c0_14, %c0_15] : memref<128x1xf32, #tpu.memory_space<vmem>>, vector<128x1xf32>
    tpu.vector_store %arg6[%c0_14, %c0_15], %19 {strides = array<i32>} : memref<128x1xf32, #tpu.memory_space<vmem>>, vector<128x1xf32>,
    %cst_16 = arith.constant dense<0xFF800000> : vector<256xf32>
    %31 = vector.multi_reduction <maximumf>, %14, %cst_16 [0] : vector<128x256xf32> to vector<256xf32>
    %32 = vector.shape_cast %31 : vector<256xf32> to vector<1x256xf32>
    %33 = vector.broadcast %32 : vector<1x256xf32> to vector<128x256xf32>
    %34 = arith.subf %14, %33 : vector<128x256xf32>
    %35 = math.exp %34 : vector<128x256xf32>
    %cst_17 = arith.constant dense<0.000000e+00> : vector<256xf32>
    %36 = vector.multi_reduction <add>, %35, %cst_17 [0] : vector<128x256xf32> to vector<256xf32>
    %37 = vector.shape_cast %36 : vector<256xf32> to vector<1x256xf32>
    %38 = vector.shape_cast %32 : vector<1x256xf32> to vector<1x1x256xf32>
    %c0_18 = arith.constant 0 : index
    %c0_19 = arith.constant 0 : index
    %c0_20 = arith.constant 0 : index
    %39 = vector.load %arg7[%c0_18, %c0_19, %c0_20] : memref<1x1x256xf32, #tpu.memory_space<vmem>>, vector<1x1x256xf32>
    tpu.vector_store %arg7[%c0_18, %c0_19, %c0_20], %38 {strides = array<i32>} : memref<1x1x256xf32, #tpu.memory_space<vmem>>, vector<1x1x256xf32>,
    %40 = vector.shape_cast %37 : vector<1x256xf32> to vector<1x1x256xf32>
    %c0_21 = arith.constant 0 : index
    %c0_22 = arith.constant 0 : index
    %c0_23 = arith.constant 0 : index
    %41 = vector.load %arg8[%c0_21, %c0_22, %c0_23] : memref<1x1x256xf32, #tpu.memory_space<vmem>>, vector<1x1x256xf32>
    tpu.vector_store %arg8[%c0_21, %c0_22, %c0_23], %40 {strides = array<i32>} : memref<1x1x256xf32, #tpu.memory_space<vmem>>, vector<1x1x256xf32>,
    return
  }
  func.func @transform_0(%arg0: i32) -> (i32, i32) {
    %c0_i32 = arith.constant 0 : i32
    %c0_i32_0 = arith.constant 0 : i32
    %c0_i32_1 = arith.constant 0 : i32
    return %c0_i32, %c0_i32_0 : i32, i32
  }
  func.func @transform_1(%arg0: i32) -> (i32, i32) {
    %c0_i32 = arith.constant 0 : i32
    %c0_i32_0 = arith.constant 0 : i32
    return %arg0, %c0_i32 : i32, i32
  }
  func.func @transform_2(%arg0: i32) -> (i32, i32) {
    %c0_i32 = arith.constant 0 : i32
    %c0_i32_0 = arith.constant 0 : i32
    %c0_i32_1 = arith.constant 0 : i32
    return %c0_i32, %c0_i32_0 : i32, i32
  }
  func.func @transform_3(%arg0: i32) -> (i32, i32) {
    %c0_i32 = arith.constant 0 : i32
    %c0_i32_0 = arith.constant 0 : i32
    return %arg0, %c0_i32 : i32, i32
  }
  func.func @transform_4(%arg0: i32) -> (i32, i32) {
    %c0_i32 = arith.constant 0 : i32
    %c0_i32_0 = arith.constant 0 : i32
    return %arg0, %c0_i32 : i32, i32
  }
  func.func @transform_5(%arg0: i32) -> (i32, i32) {
    %c0_i32 = arith.constant 0 : i32
    %c0_i32_0 = arith.constant 0 : i32
    return %arg0, %c0_i32 : i32, i32
  }
  func.func @transform_6(%arg0: i32) -> (i32, i32, i32) {
    %c0_i32 = arith.constant 0 : i32
    %c0_i32_0 = arith.constant 0 : i32
    %c0_i32_1 = arith.constant 0 : i32
    return %arg0, %c0_i32, %c0_i32_0 : i32, i32, i32
  }
  func.func @transform_7(%arg0: i32) -> (i32, i32, i32) {
    %c0_i32 = arith.constant 0 : i32
    %c0_i32_0 = arith.constant 0 : i32
    %c0_i32_1 = arith.constant 0 : i32
    return %arg0, %c0_i32, %c0_i32_0 : i32, i32, i32
  }
}

</mosaic_0001>

<llo_original>
// kernel: clip_loss.1
$region0: #{clip_loss.1}
  #allocation0 [shape = 'u32[]', space=smem, size = 0x4, offset = 0x4, fixed_abs, tag = 'smem constant byte address 0x4 - core index']
  #allocation1 [shape = 'u32[144,128]{1,0:T(1,128)}', space=vmem, size = 0x12000, scoped, tag = 'internal scratch']
  #allocation2 [shape = 'f32[1,1]{1,0:T(1,128)S(6)}', space=smem, size = 0x200, scoped, tag = 'scoped memory for clip_loss.1']
  %s0 = inlined_call_operand.<no memory space> [shape: f32[1,1], index: 0, kind: input, shape index: {}]
  %s1 = inlined_call_operand.vmem [shape: f32[256,128], index: 1, kind: input, shape index: {}]
  %s2 = inlined_call_operand.vmem [shape: bf16[128,256], index: 2, kind: input, shape index: {}]
  %s3 = inlined_call_operand.vmem [shape: bf16[256,128], index: 3, kind: input, shape index: {}]
  %s4 = inlined_call_operand.vmem [shape: f32[256,1], index: 4, kind: output, shape index: {0}]
  %s5 = inlined_call_operand.vmem [shape: f32[256,1], index: 5, kind: output, shape index: {1}]
  %s6 = inlined_call_operand.vmem [shape: f32[2,1,256], index: 6, kind: output, shape index: {2}]
  %s7 = inlined_call_operand.vmem [shape: f32[2,1,256], index: 7, kind: output, shape index: {3}]
  %8 = xla_tuple %s4, %s5, %s6, %s7
  %s9 = sld [smem:[#allocation0]]
  $region73: #{clip_loss.1} parent=0
    _
  %s11 = ssub.s32 1, %s9
  %s12 = scalar_select 0, %s11, %s9
  %13 = sst [smem:[#allocation2]] %s0
  loop: start=0, step=1, limit=4
  $region2: #{clip_loss.1} parent=0 // loop_pre_header
    _
  $region3: #{clip_loss.1} parent=0 // loop_header
    %s15 = sphi 0, %s19
    %p16 = scmp.ge.s32.totalorder %s15, 4
    %s23 = sphi 0, %s23
    %s25 = sphi 0, %s23
    %s26 = sphi 0, %s25
    %s40 = sphi 0, %s26
    %s46 = sphi 0, %s48
    %s49 = sphi 0, %s46
    %s50 = sphi 0, %s49
    %s66 = sphi 0, %s50
    %s70 = sphi 0, %s70
    %s72 = sphi 0, %s70
    %s73 = sphi 0, %s72
    %s87 = sphi 0, %s73
    %s93 = sphi 0, %s95
    %s96 = sphi 0, %s93
    %s97 = sphi 0, %s96
    %s113 = sphi 0, %s97
    %s119 = sphi 0, %s121
    %s122 = sphi 0, %s119
    %s123 = sphi 0, %s122
    %s139 = sphi 0, %s123
    %s145 = sphi 0, %s147
    %s148 = sphi 0, %s145
    %s149 = sphi 0, %s148
    %s165 = sphi 0, %s149
    %s171 = sphi 0, %s173
    %s174 = sphi 0, %s171
    %s175 = sphi 0, %s174
    %s191 = sphi 0, %s175
    %s197 = sphi 0, %s199
    %s200 = sphi 0, %s197
    %s201 = sphi 0, %s200
    %s217 = sphi 0, %s201
  $region4: #{clip_loss.1} parent=0 // loop_header_branch
    %18 = sbr.rel (%p16) target = $region8
  $region5: #{clip_loss.1} parent=0 // loop_body
    %s20 = ssub.s32 %s15, 1
    %s21 = ssub.s32 %s15, 2
    %s22 = sadd.s32 %s15, 1
    %s24 = sadd.s32 %s23, 1
    %p27 = scmp.eq.s32.totalorder %s15, 1
    %p28 = scmp.ne.s32.totalorder %s23, %s25
    %p29 = scmp.eq.s32.totalorder %s15, 0
    %p30 = por %p28, %p29
    %p31 = scmp.ne.s32.totalorder %s23, %s25
    %p32 = scmp.eq.s32.totalorder %s20, 1
    %p33 = por %p31, %p32
    %p34 = scmp.ne.s32.totalorder %s25, %s26
    %p35 = scmp.eq.s32.totalorder %s20, 0
    %p36 = por %p34, %p35
    %p37 = scmp.ne.s32.totalorder %s25, %s26
    %p38 = scmp.eq.s32.totalorder %s21, 1
    %p39 = por %p37, %p38
    %p41 = scmp.ne.s32.totalorder %s26, %s40
    %p42 = scmp.eq.s32.totalorder %s21, 0
    %p43 = por %p41, %p42
    %s44 = ssub.s32 %s15, %s22
    %p45 = scmp.eq.s32.totalorder %s44, 0
    %s47 = sadd.s32 %s46, 1
    %s48 = scalar_select %p45, %s46, %s47
    %p51 = pneg %p45
    %p52 = scmp.eq.s32.totalorder %s15, 1
    %p53 = por %p51, %p52
    %p54 = scmp.ne.s32.totalorder %s46, %s49
    %p55 = scmp.eq.s32.totalorder %s15, 0
    %p56 = por %p54, %p55
    %p57 = scmp.ne.s32.totalorder %s46, %s49
    %p58 = scmp.eq.s32.totalorder %s20, 1
    %p59 = por %p57, %p58
    %p60 = scmp.ne.s32.totalorder %s49, %s50
    %p61 = scmp.eq.s32.totalorder %s20, 0
    %p62 = por %p60, %p61
    %p63 = scmp.ne.s32.totalorder %s49, %s50
    %p64 = scmp.eq.s32.totalorder %s21, 1
    %p65 = por %p63, %p64
    %p67 = scmp.ne.s32.totalorder %s50, %s66
    %p68 = scmp.eq.s32.totalorder %s21, 0
    %p69 = por %p67, %p68
    %s71 = sadd.s32 %s70, 1
    %p74 = scmp.eq.s32.totalorder %s15, 1
    %p75 = scmp.ne.s32.totalorder %s70, %s72
    %p76 = scmp.eq.s32.totalorder %s15, 0
    %p77 = por %p75, %p76
    %p78 = scmp.ne.s32.totalorder %s70, %s72
    %p79 = scmp.eq.s32.totalorder %s20, 1
    %p80 = por %p78, %p79
    %p81 = scmp.ne.s32.totalorder %s72, %s73
    %p82 = scmp.eq.s32.totalorder %s20, 0
    %p83 = por %p81, %p82
    %p84 = scmp.ne.s32.totalorder %s72, %s73
    %p85 = scmp.eq.s32.totalorder %s21, 1
    %p86 = por %p84, %p85
    %p88 = scmp.ne.s32.totalorder %s73, %s87
    %p89 = scmp.eq.s32.totalorder %s21, 0
    %p90 = por %p88, %p89
    %s91 = ssub.s32 %s15, %s22
    %p92 = scmp.eq.s32.totalorder %s91, 0
    %s94 = sadd.s32 %s93, 1
    %s95 = scalar_select %p92, %s93, %s94
    %p98 = pneg %p92
    %p99 = scmp.eq.s32.totalorder %s15, 1
    %p100 = por %p98, %p99
    %p101 = scmp.ne.s32.totalorder %s93, %s96
    %p102 = scmp.eq.s32.totalorder %s15, 0
    %p103 = por %p101, %p102
    %p104 = scmp.ne.s32.totalorder %s93, %s96
    %p105 = scmp.eq.s32.totalorder %s20, 1
    %p106 = por %p104, %p105
    %p107 = scmp.ne.s32.totalorder %s96, %s97
    %p108 = scmp.eq.s32.totalorder %s20, 0
    %p109 = por %p107, %p108
    %p110 = scmp.ne.s32.totalorder %s96, %s97
    %p111 = scmp.eq.s32.totalorder %s21, 1
    %p112 = por %p110, %p111
    %p114 = scmp.ne.s32.totalorder %s97, %s113
    %p115 = scmp.eq.s32.totalorder %s21, 0
    %p116 = por %p114, %p115
    %s117 = ssub.s32 %s15, %s22
    %p118 = scmp.eq.s32.totalorder %s117, 0
    %s120 = sadd.s32 %s119, 1
    %s121 = scalar_select %p118, %s119, %s120
    %p124 = pneg %p118
    %p125 = scmp.eq.s32.totalorder %s15, 1
    %p126 = por %p124, %p125
    %p127 = scmp.ne.s32.totalorder %s119, %s122
    %p128 = scmp.eq.s32.totalorder %s15, 0
    %p129 = por %p127, %p128
    %p130 = scmp.ne.s32.totalorder %s119, %s122
    %p131 = scmp.eq.s32.totalorder %s20, 1
    %p132 = por %p130, %p131
    %p133 = scmp.ne.s32.totalorder %s122, %s123
    %p134 = scmp.eq.s32.totalorder %s20, 0
    %p135 = por %p133, %p134
    %p136 = scmp.ne.s32.totalorder %s122, %s123
    %p137 = scmp.eq.s32.totalorder %s21, 1
    %p138 = por %p136, %p137
    %p140 = scmp.ne.s32.totalorder %s123, %s139
    %p141 = scmp.eq.s32.totalorder %s21, 0
    %p142 = por %p140, %p141
    %s143 = ssub.s32 %s15, %s22
    %p144 = scmp.eq.s32.totalorder %s143, 0
    %s146 = sadd.s32 %s145, 1
    %s147 = scalar_select %p144, %s145, %s146
    %p150 = pneg %p144
    %p151 = scmp.eq.s32.totalorder %s15, 1
    %p152 = por %p150, %p151
    %p153 = scmp.ne.s32.totalorder %s145, %s148
    %p154 = scmp.eq.s32.totalorder %s15, 0
    %p155 = por %p153, %p154
    %p156 = scmp.ne.s32.totalorder %s145, %s148
    %p157 = scmp.eq.s32.totalorder %s20, 1
    %p158 = por %p156, %p157
    %p159 = scmp.ne.s32.totalorder %s148, %s149
    %p160 = scmp.eq.s32.totalorder %s20, 0
    %p161 = por %p159, %p160
    %p162 = scmp.ne.s32.totalorder %s148, %s149
    %p163 = scmp.eq.s32.totalorder %s21, 1
    %p164 = por %p162, %p163
    %p166 = scmp.ne.s32.totalorder %s149, %s165
    %p167 = scmp.eq.s32.totalorder %s21, 0
    %p168 = por %p166, %p167
    %s169 = ssub.s32 %s15, %s22
    %p170 = scmp.eq.s32.totalorder %s169, 0
    %s172 = sadd.s32 %s171, 1
    %s173 = scalar_select %p170, %s171, %s172
    %p176 = pneg %p170
    %p177 = scmp.eq.s32.totalorder %s15, 1
    %p178 = por %p176, %p177
    %p179 = scmp.ne.s32.totalorder %s171, %s174
    %p180 = scmp.eq.s32.totalorder %s15, 0
    %p181 = por %p179, %p180
    %p182 = scmp.ne.s32.totalorder %s171, %s174
    %p183 = scmp.eq.s32.totalorder %s20, 1
    %p184 = por %p182, %p183
    %p185 = scmp.ne.s32.totalorder %s174, %s175
    %p186 = scmp.eq.s32.totalorder %s20, 0
    %p187 = por %p185, %p186
    %p188 = scmp.ne.s32.totalorder %s174, %s175
    %p189 = scmp.eq.s32.totalorder %s21, 1
    %p190 = por %p188, %p189
    %p192 = scmp.ne.s32.totalorder %s175, %s191
    %p193 = scmp.eq.s32.totalorder %s21, 0
    %p194 = por %p192, %p193
    %s195 = ssub.s32 %s15, %s22
    %p196 = scmp.eq.s32.totalorder %s195, 0
    %s198 = sadd.s32 %s197, 1
    %s199 = scalar_select %p196, %s197, %s198
    %p202 = pneg %p196
    %p203 = scmp.eq.s32.totalorder %s15, 1
    %p204 = por %p202, %p203
    %p205 = scmp.ne.s32.totalorder %s197, %s200
    %p206 = scmp.eq.s32.totalorder %s15, 0
    %p207 = por %p205, %p206
    %p208 = scmp.ne.s32.totalorder %s197, %s200
    %p209 = scmp.eq.s32.totalorder %s20, 1
    %p210 = por %p208, %p209
    %p211 = scmp.ne.s32.totalorder %s200, %s201
    %p212 = scmp.eq.s32.totalorder %s20, 0
    %p213 = por %p211, %p212
    %p214 = scmp.ne.s32.totalorder %s200, %s201
    %p215 = scmp.eq.s32.totalorder %s21, 1
    %p216 = por %p214, %p215
    %p218 = scmp.ne.s32.totalorder %s201, %s217
    %p219 = scmp.eq.s32.totalorder %s21, 0
    %p220 = por %p218, %p219
    %p221 = scmp.le.s32.totalorder 1, %s15
    %p222 = scmp.lt.s32.totalorder %s15, 3
    %p223 = pnand %p221, %p222
    %p224 = pneg %p223
    // Predicated region
    $region9: #{clip_loss.1} parent=5 // pred_check
      _
    $region10: #{clip_loss.1} parent=5 // pred_check_branch
      %226 = sbr.rel (%p223) target = $region12
    $region11: #{clip_loss.1} parent=5 // pred_region
      %s227 = ssub.s32 %s15, 1
      // Predicated region
      $region13: #{clip_loss.1} parent=11 // pred_check
        %p228 = pneg %p36
      $region14: #{clip_loss.1} parent=11 // pred_check_branch
        %230 = sbr.rel (%p228) target = $region16
      $region15: #{clip_loss.1} parent=11 // pred_region
        _
      $region16: #{clip_loss.1} parent=11 // pred_fallthru
        _
      // Predicated region
      $region17: #{clip_loss.1} parent=11 // pred_check
        %p231 = pneg %p83
      $region18: #{clip_loss.1} parent=11 // pred_check_branch
        %233 = sbr.rel (%p231) target = $region20
      $region19: #{clip_loss.1} parent=11 // pred_region
        _
      $region20: #{clip_loss.1} parent=11 // pred_fallthru
        _
    $region12: #{clip_loss.1} parent=5 // pred_fallthru
      _
    %p234 = scmp.lt.s32.totalorder %s15, 2
    // Predicated region
    $region21: #{clip_loss.1} parent=5 // pred_check
      %p235 = pneg %p234
    $region22: #{clip_loss.1} parent=5 // pred_check_branch
      %237 = sbr.rel (%p235) target = $region24
    $region23: #{clip_loss.1} parent=5 // pred_region
      // Predicated region
      $region25: #{clip_loss.1} parent=23 // pred_check
        %p238 = pneg %p56
      $region26: #{clip_loss.1} parent=23 // pred_check_branch
        %240 = sbr.rel (%p238) target = $region28
      $region27: #{clip_loss.1} parent=23 // pred_region
        %s241 = smul.u32 16, %s15
        %p242 = scmp.lt.s32.totalorder %s241, 31
        %s243 = scalar_select %p242, %s241, 31
        %s244 = smul.addr %s243, 8
        %s245 = scalar_lea.vmem %s1, %s244
        %s246 = smul.u32 16, %s15
      $region28: #{clip_loss.1} parent=23 // pred_fallthru
        _
      // Predicated region
      $region29: #{clip_loss.1} parent=23 // pred_check
        %p247 = pneg %p103
      $region30: #{clip_loss.1} parent=23 // pred_check_branch
        %249 = sbr.rel (%p247) target = $region32
      $region31: #{clip_loss.1} parent=23 // pred_region
        %s250 = smul.u32 16, %s15
        %p251 = scmp.lt.s32.totalorder %s250, 31
        %s252 = scalar_select %p251, %s250, 31
        %s253 = smul.addr %s252, 4
        %s254 = scalar_lea.vmem %s3, %s253
        %s255 = smul.u32 16, %s15
      $region32: #{clip_loss.1} parent=23 // pred_fallthru
        _
    $region24: #{clip_loss.1} parent=5 // pred_fallthru
      _
    %p256 = scmp.le.s32.totalorder 1, %s15
    %p257 = scmp.lt.s32.totalorder %s15, 3
    %p258 = pnand %p256, %p257
    %p259 = pneg %p258
    // Predicated region
    $region33: #{clip_loss.1} parent=5 // pred_check
      _
    $region34: #{clip_loss.1} parent=5 // pred_check_branch
      %261 = sbr.rel (%p258) target = $region36
    $region35: #{clip_loss.1} parent=5 // pred_region
      %s262 = ssub.s32 %s15, 1
      %p263 = pneg %p36
      %p264 = pneg %p33
      %s265 = smul.u32 16, %s20
      %p266 = scmp.lt.s32.totalorder %s265, 31
      %s267 = scalar_select %p266, %s265, 31
      %s268 = smul.addr %s267, 8
      %s269 = scalar_lea.vmem %s1, %s268
      %p270 = pneg %p62
      %p271 = pneg %p59
      %p272 = pneg %p83
      %p273 = pneg %p80
      %s274 = smul.u32 16, %s20
      %p275 = scmp.lt.s32.totalorder %s274, 31
      %s276 = scalar_select %p275, %s274, 31
      %s277 = smul.addr %s276, 4
      %s278 = scalar_lea.vmem %s3, %s277
      %p279 = pneg %p109
      %p280 = pneg %p106
      %p281 = pneg %p135
      %p282 = pneg %p132
      %s283 = smul.u32 16, %s20
      %p284 = scmp.lt.s32.totalorder %s283, 31
      %s285 = scalar_select %p284, %s283, 31
      %s286 = smul.addr %s285, 8
      %s287 = scalar_lea.vmem %s4, %s286
      %p288 = pneg %p161
      %p289 = pneg %p158
      %s290 = smul.u32 16, %s20
      %p291 = scmp.lt.s32.totalorder %s290, 31
      %s292 = scalar_select %p291, %s290, 31
      %s293 = smul.addr %s292, 8
      %s294 = scalar_lea.vmem %s5, %s293
      %p295 = pneg %p187
      %p296 = pneg %p184
      %p297 = scmp.lt.s32.totalorder %s20, 1
      %s298 = scalar_select %p297, %s20, 1
      %s299 = smul.addr %s298, 2
      %s300 = scalar_lea.vmem %s6, %s299
      %p301 = pneg %p213
      %p302 = pneg %p210
      %p303 = scmp.lt.s32.totalorder %s20, 1
      %s304 = scalar_select %p303, %s20, 1
      %s305 = smul.addr %s304, 2
      %s306 = scalar_lea.vmem %s7, %s305
      %s307 = smul.u32 16, %s20
      %p308 = scmp.lt.s32.totalorder %s307, 31
      %s309 = scalar_select %p308, %s307, 31
      %s310 = smul.addr %s309, 8
      %s311 = scalar_lea.vmem %s1, %s310
      %s312 = smul.u32 16, %s20
      %s313 = smul.u32 16, %s20
      %p314 = scmp.lt.s32.totalorder %s313, 31
      %s315 = scalar_select %p314, %s313, 31
      %s316 = smul.addr %s315, 4
      %s317 = scalar_lea.vmem %s3, %s316
      %s318 = smul.u32 16, %s20
      %s319 = smul.u32 16, %s20
      %p320 = scmp.lt.s32.totalorder %s319, 31
      %s321 = scalar_select %p320, %s319, 31
      %s322 = smul.addr %s321, 8
      %s323 = scalar_lea.vmem %s4, %s322
      %s324 = smul.u32 16, %s20
      %s325 = smul.u32 16, %s20
      %p326 = scmp.lt.s32.totalorder %s325, 31
      %s327 = scalar_select %p326, %s325, 31
      %s328 = smul.addr %s327, 8
      %s329 = scalar_lea.vmem %s5, %s328
      %s330 = smul.u32 16, %s20
      %p331 = scmp.lt.s32.totalorder %s20, 1
      %s332 = scalar_select %p331, %s20, 1
      %s333 = smul.addr %s332, 2
      %s334 = scalar_lea.vmem %s6, %s333
      %p335 = scmp.lt.s32.totalorder %s20, 1
      %s336 = scalar_select %p335, %s20, 1
      %s337 = smul.addr %s336, 2
      %s338 = scalar_lea.vmem %s7, %s337
      %s340 = sld [smem:[#allocation2]]
      %v341 = vld [vmem:[%s311] sm:$0xff]
      %v342 = vld [vmem:[%s311 + $0x8] sm:$0xff]
      %v343 = vld [vmem:[%s311 + $0x10] sm:$0xff]
      %v344 = vld [vmem:[%s311 + $0x18] sm:$0xff]
      %v345 = vld [vmem:[%s311 + $0x20] sm:$0xff]
      %v346 = vld [vmem:[%s311 + $0x28] sm:$0xff]
      %v347 = vld [vmem:[%s311 + $0x30] sm:$0xff]
      %v348 = vld [vmem:[%s311 + $0x38] sm:$0xff]
      %v349 = vld [vmem:[%s311 + $0x40] sm:$0xff]
      %v350 = vld [vmem:[%s311 + $0x48] sm:$0xff]
      %v351 = vld [vmem:[%s311 + $0x50] sm:$0xff]
      %v352 = vld [vmem:[%s311 + $0x58] sm:$0xff]
      %v353 = vld [vmem:[%s311 + $0x60] sm:$0xff]
      %v354 = vld [vmem:[%s311 + $0x68] sm:$0xff]
      %v355 = vld [vmem:[%s311 + $0x70] sm:$0xff]
      %v356 = vld [vmem:[%s311 + $0x78] sm:$0xff]
      %v357 = vmul.f32 %v341, %v341
      %v358 = vmul.f32 %v342, %v342
      %v359 = vmul.f32 %v343, %v343
      %v360 = vmul.f32 %v344, %v344
      %v361 = vmul.f32 %v345, %v345
      %v362 = vmul.f32 %v346, %v346
      %v363 = vmul.f32 %v347, %v347
      %v364 = vmul.f32 %v348, %v348
      %v365 = vmul.f32 %v349, %v349
      %v366 = vmul.f32 %v350, %v350
      %v367 = vmul.f32 %v351, %v351
      %v368 = vmul.f32 %v352, %v352
      %v369 = vmul.f32 %v353, %v353
      %v370 = vmul.f32 %v354, %v354
      %v371 = vmul.f32 %v355, %v355
      %v372 = vmul.f32 %v356, %v356
      %373 = vadd.xlane.f32.xlu0 %v357
      %v374 = vpop.xlane.xlu0 %373
      %375 = vadd.xlane.f32.xlu0 %v358
      %v376 = vpop.xlane.xlu0 %375
      %377 = vadd.xlane.f32.xlu0 %v359
      %v378 = vpop.xlane.xlu0 %377
      %379 = vadd.xlane.f32.xlu0 %v360
      %v380 = vpop.xlane.xlu0 %379
      %381 = vadd.xlane.f32.xlu0 %v361
      %v382 = vpop.xlane.xlu0 %381
      %383 = vadd.xlane.f32.xlu0 %v362
      %v384 = vpop.xlane.xlu0 %383
      %385 = vadd.xlane.f32.xlu0 %v363
      %v386 = vpop.xlane.xlu0 %385
      %387 = vadd.xlane.f32.xlu0 %v364
      %v388 = vpop.xlane.xlu0 %387
      %389 = vadd.xlane.f32.xlu0 %v365
      %v390 = vpop.xlane.xlu0 %389
      %391 = vadd.xlane.f32.xlu0 %v366
      %v392 = vpop.xlane.xlu0 %391
      %393 = vadd.xlane.f32.xlu0 %v367
      %v394 = vpop.xlane.xlu0 %393
      %395 = vadd.xlane.f32.xlu0 %v368
      %v396 = vpop.xlane.xlu0 %395
      %397 = vadd.xlane.f32.xlu0 %v369
      %v398 = vpop.xlane.xlu0 %397
      %399 = vadd.xlane.f32.xlu0 %v370
      %v400 = vpop.xlane.xlu0 %399
      %401 = vadd.xlane.f32.xlu0 %v371
      %v402 = vpop.xlane.xlu0 %401
      %403 = vadd.xlane.f32.xlu0 %v372
      %v404 = vpop.xlane.xlu0 %403
      %v405 = vmax.f32 %v374, 1e-24
      %v406 = vmax.f32 %v376, 1e-24
      %v407 = vmax.f32 %v378, 1e-24
      %v408 = vmax.f32 %v380, 1e-24
      %v409 = vmax.f32 %v382, 1e-24
      %v410 = vmax.f32 %v384, 1e-24
      %v411 = vmax.f32 %v386, 1e-24
      %v412 = vmax.f32 %v388, 1e-24
      %v413 = vmax.f32 %v390, 1e-24
      %v414 = vmax.f32 %v392, 1e-24
      %v415 = vmax.f32 %v394, 1e-24
      %v416 = vmax.f32 %v396, 1e-24
      %v417 = vmax.f32 %v398, 1e-24
      %v418 = vmax.f32 %v400, 1e-24
      %v419 = vmax.f32 %v402, 1e-24
      %v420 = vmax.f32 %v404, 1e-24
      %v421 = vrsqrt.pop %v405
      %v422 = vrsqrt.pop %v406
      %v423 = vrsqrt.pop %v407
      %v424 = vrsqrt.pop %v408
      %v425 = vrsqrt.pop %v409
      %v426 = vrsqrt.pop %v410
      %v427 = vrsqrt.pop %v411
      %v428 = vrsqrt.pop %v412
      %v429 = vrsqrt.pop %v413
      %v430 = vrsqrt.pop %v414
      %v431 = vrsqrt.pop %v415
      %v432 = vrsqrt.pop %v416
      %v433 = vrsqrt.pop %v417
      %v434 = vrsqrt.pop %v418
      %v435 = vrsqrt.pop %v419
      %v436 = vrsqrt.pop %v420
      %v437 = vstv %s340
      %v438 = vmul.f32 %v421, %v437
      %v439 = vmul.f32 %v422, %v437
      %v440 = vmul.f32 %v423, %v437
      %v441 = vmul.f32 %v424, %v437
      %v442 = vmul.f32 %v425, %v437
      %v443 = vmul.f32 %v426, %v437
      %v444 = vmul.f32 %v427, %v437
      %v445 = vmul.f32 %v428, %v437
      %v446 = vmul.f32 %v429, %v437
      %v447 = vmul.f32 %v430, %v437
      %v448 = vmul.f32 %v431, %v437
      %v449 = vmul.f32 %v432, %v437
      %v450 = vmul.f32 %v433, %v437
      %v451 = vmul.f32 %v434, %v437
      %v452 = vmul.f32 %v435, %v437
      %v453 = vmul.f32 %v436, %v437
      %v454 = vmul.f32 %v341, %v438
      %v455 = vmul.f32 %v342, %v439
      %v456 = vmul.f32 %v343, %v440
      %v457 = vmul.f32 %v344, %v441
      %v458 = vmul.f32 %v345, %v442
      %v459 = vmul.f32 %v346, %v443
      %v460 = vmul.f32 %v347, %v444
      %v461 = vmul.f32 %v348, %v445
      %v462 = vmul.f32 %v349, %v446
      %v463 = vmul.f32 %v350, %v447
      %v464 = vmul.f32 %v351, %v448
      %v465 = vmul.f32 %v352, %v449
      %v466 = vmul.f32 %v353, %v450
      %v467 = vmul.f32 %v354, %v451
      %v468 = vmul.f32 %v355, %v452
      %v469 = vmul.f32 %v356, %v453
      %v470 = vpack.c.bf16 %v455, %v454
      %v471 = vpack.c.bf16 %v457, %v456
      %v472 = vpack.c.bf16 %v459, %v458
      %v473 = vpack.c.bf16 %v461, %v460
      %v474 = vpack.c.bf16 %v463, %v462
      %v475 = vpack.c.bf16 %v465, %v464
      %v476 = vpack.c.bf16 %v467, %v466
      %v477 = vpack.c.bf16 %v469, %v468
      %v478 = vld [vmem:[%s2] sm:$0xff]
      %v479 = vld [vmem:[%s2 + $0x8] sm:$0xff]
      %v480 = vld [vmem:[%s2 + $0x10] sm:$0xff]
      %v481 = vld [vmem:[%s2 + $0x18] sm:$0xff]
      %v482 = vld [vmem:[%s2 + $0x20] sm:$0xff]
      %v483 = vld [vmem:[%s2 + $0x28] sm:$0xff]
      %v484 = vld [vmem:[%s2 + $0x30] sm:$0xff]
      %v485 = vld [vmem:[%s2 + $0x38] sm:$0xff]
      %v486 = vld [vmem:[%s2 + $0x40] sm:$0xff]
      %v487 = vld [vmem:[%s2 + $0x48] sm:$0xff]
      %v488 = vld [vmem:[%s2 + $0x50] sm:$0xff]
      %v489 = vld [vmem:[%s2 + $0x58] sm:$0xff]
      %v490 = vld [vmem:[%s2 + $0x60] sm:$0xff]
      %v491 = vld [vmem:[%s2 + $0x68] sm:$0xff]
      %v492 = vld [vmem:[%s2 + $0x70] sm:$0xff]
      %v493 = vld [vmem:[%s2 + $0x78] sm:$0xff]
      %v510 = vunpack.c.l.b16 %v478
      %v511 = vunpack.c.h.b16 %v478
      %v512 = vunpack.c.l.b16 %v479
      %v513 = vunpack.c.h.b16 %v479
      %v514 = vunpack.c.l.b16 %v480
      %v515 = vunpack.c.h.b16 %v480
      %v516 = vunpack.c.l.b16 %v481
      %v517 = vunpack.c.h.b16 %v481
      %v518 = vunpack.c.l.b16 %v482
      %v519 = vunpack.c.h.b16 %v482
      %v520 = vunpack.c.l.b16 %v483
      %v521 = vunpack.c.h.b16 %v483
      %v522 = vunpack.c.l.b16 %v484
      %v523 = vunpack.c.h.b16 %v484
      %v524 = vunpack.c.l.b16 %v485
      %v525 = vunpack.c.h.b16 %v485
      %v526 = vunpack.c.l.b16 %v486
      %v527 = vunpack.c.h.b16 %v486
      %v528 = vunpack.c.l.b16 %v487
      %v529 = vunpack.c.h.b16 %v487
      %v530 = vunpack.c.l.b16 %v488
      %v531 = vunpack.c.h.b16 %v488
      %v532 = vunpack.c.l.b16 %v489
      %v533 = vunpack.c.h.b16 %v489
      %v534 = vunpack.c.l.b16 %v490
      %v535 = vunpack.c.h.b16 %v490
      %v536 = vunpack.c.l.b16 %v491
      %v537 = vunpack.c.h.b16 %v491
      %v538 = vunpack.c.l.b16 %v492
      %v539 = vunpack.c.h.b16 %v492
      %v540 = vunpack.c.l.b16 %v493
      %v541 = vunpack.c.h.b16 %v493
      %v542 = vpack.c.b16 %v512, %v510
      %v543 = vpack.c.b16 %v513, %v511
      %v544 = vpack.c.b16 %v516, %v514
      %v545 = vpack.c.b16 %v517, %v515
      %v546 = vpack.c.b16 %v520, %v518
      %v547 = vpack.c.b16 %v521, %v519
      %v548 = vpack.c.b16 %v524, %v522
      %v549 = vpack.c.b16 %v525, %v523
      %v550 = vpack.c.b16 %v528, %v526
      %v551 = vpack.c.b16 %v529, %v527
      %v552 = vpack.c.b16 %v532, %v530
      %v553 = vpack.c.b16 %v533, %v531
      %v554 = vpack.c.b16 %v536, %v534
      %v555 = vpack.c.b16 %v537, %v535
      %v556 = vpack.c.b16 %v540, %v538
      %v557 = vpack.c.b16 %v541, %v539
      %574 = vmatprep.subr.bf16.mxu0 %v557
      %575 = vmatpush1.bf16.msra.mxu0 %v556
      %576 = vmatprep.subr.bf16.mxu0 %v555
      %577 = vmatpush1.bf16.msra.mxu0 %v554
      %578 = vmatprep.subr.bf16.mxu0 %v553
      %579 = vmatpush1.bf16.msra.mxu0 %v552
      %580 = vmatprep.subr.bf16.mxu0 %v551
      %581 = vmatpush1.bf16.msra.mxu0 %v550
      %582 = vmatprep.subr.bf16.mxu0 %v549
      %583 = vmatpush1.bf16.msra.mxu0 %v548
      %584 = vmatprep.subr.bf16.mxu0 %v547
      %585 = vmatpush1.bf16.msra.mxu0 %v546
      %586 = vmatprep.subr.bf16.mxu0 %v545
      %587 = vmatpush1.bf16.msra.mxu0 %v544
      %588 = vmatprep.subr.bf16.mxu0 %v543
      %589 = vmatpush1.bf16.msra.mxu0 %v542
      %590 = vmatprep.subr.bf16.mxu0 0
      %591 = vmatpush2.bf16.msra.mxu0 0
      %592 = vmatprep.subr.bf16.mxu0 0
      %593 = vmatpush2.bf16.msra.mxu0 0
      %594 = vmatprep.subr.bf16.mxu0 0
      %595 = vmatpush2.bf16.msra.mxu0 0
      %596 = vmatprep.subr.bf16.mxu0 0
      %597 = vmatpush2.bf16.msra.mxu0 0
      %598 = vmatprep.subr.bf16.mxu0 0
      %599 = vmatpush2.bf16.msra.mxu0 0
      %600 = vmatprep.subr.bf16.mxu0 0
      %601 = vmatpush2.bf16.msra.mxu0 0
      %602 = vmatprep.subr.bf16.mxu0 0
      %603 = vmatpush2.bf16.msra.mxu0 0
      %604 = vmatprep.subr.bf16.mxu0 0
      %605 = vmatpush2.bf16.msra.mxu0 0
      %606 = vmatprep.mubr.bf16.mxu0 0
      %607 = vmatmul.mubr.bf16.gmra.mxu0 %v470
      %v608 = vpop.f32.mrf.mxu0
      %v609 = vadd.f32 0.0, %v608
      %v610 = vpop.f32.mrf.mxu0
      %v611 = vadd.f32 0.0, %v610
      %v612 = vpop.f32.mrf.mxu0
      %v613 = vadd.f32 0.0, %v612
      %v614 = vpop.f32.mrf.mxu0
      %v615 = vadd.f32 0.0, %v614
      %616 = vmatprep.mubr.bf16.mxu0 0
      %617 = vmatmul.mubr.bf16.gmra.mxu0 %v471
      %v618 = vpop.f32.mrf.mxu0
      %v619 = vadd.f32 0.0, %v618
      %v620 = vpop.f32.mrf.mxu0
      %v621 = vadd.f32 0.0, %v620
      %v622 = vpop.f32.mrf.mxu0
      %v623 = vadd.f32 0.0, %v622
      %v624 = vpop.f32.mrf.mxu0
      %v625 = vadd.f32 0.0, %v624
      %626 = vmatprep.mubr.bf16.mxu0 0
      %627 = vmatmul.mubr.bf16.gmra.mxu0 %v472
      %v628 = vpop.f32.mrf.mxu0
      %v629 = vadd.f32 0.0, %v628
      %v630 = vpop.f32.mrf.mxu0
      %v631 = vadd.f32 0.0, %v630
      %v632 = vpop.f32.mrf.mxu0
      %v633 = vadd.f32 0.0, %v632
      %v634 = vpop.f32.mrf.mxu0
      %v635 = vadd.f32 0.0, %v634
      %636 = vmatprep.mubr.bf16.mxu0 0
      %637 = vmatmul.mubr.bf16.gmra.mxu0 %v473
      %v638 = vpop.f32.mrf.mxu0
      %v639 = vadd.f32 0.0, %v638
      %v640 = vpop.f32.mrf.mxu0
      %v641 = vadd.f32 0.0, %v640
      %v642 = vpop.f32.mrf.mxu0
      %v643 = vadd.f32 0.0, %v642
      %v644 = vpop.f32.mrf.mxu0
      %v645 = vadd.f32 0.0, %v644
      %646 = vmatprep.mubr.bf16.mxu0 0
      %647 = vmatmul.mubr.bf16.gmra.mxu0 %v474
      %v648 = vpop.f32.mrf.mxu0
      %v649 = vadd.f32 0.0, %v648
      %v650 = vpop.f32.mrf.mxu0
      %v651 = vadd.f32 0.0, %v650
      %v652 = vpop.f32.mrf.mxu0
      %v653 = vadd.f32 0.0, %v652
      %v654 = vpop.f32.mrf.mxu0
      %v655 = vadd.f32 0.0, %v654
      %656 = vmatprep.mubr.bf16.mxu0 0
      %657 = vmatmul.mubr.bf16.gmra.mxu0 %v475
      %v658 = vpop.f32.mrf.mxu0
      %v659 = vadd.f32 0.0, %v658
      %v660 = vpop.f32.mrf.mxu0
      %v661 = vadd.f32 0.0, %v660
      %v662 = vpop.f32.mrf.mxu0
      %v663 = vadd.f32 0.0, %v662
      %v664 = vpop.f32.mrf.mxu0
      %v665 = vadd.f32 0.0, %v664
      %666 = vmatprep.mubr.bf16.mxu0 0
      %667 = vmatmul.mubr.bf16.gmra.mxu0 %v476
      %v668 = vpop.f32.mrf.mxu0
      %v669 = vadd.f32 0.0, %v668
      %v670 = vpop.f32.mrf.mxu0
      %v671 = vadd.f32 0.0, %v670
      %v672 = vpop.f32.mrf.mxu0
      %v673 = vadd.f32 0.0, %v672
      %v674 = vpop.f32.mrf.mxu0
      %v675 = vadd.f32 0.0, %v674
      %676 = vmatprep.mubr.bf16.mxu0 0
      %677 = vmatmul.mubr.bf16.gmra.mxu0 %v477
      %v678 = vpop.f32.mrf.mxu0
      %v679 = vadd.f32 0.0, %v678
      %v680 = vpop.f32.mrf.mxu0
      %v681 = vadd.f32 0.0, %v680
      %v682 = vpop.f32.mrf.mxu0
      %v683 = vadd.f32 0.0, %v682
      %v684 = vpop.f32.mrf.mxu0
      %v685 = vadd.f32 0.0, %v684
      %686 = vdwg.mxu0
      %v687 = vld [vmem:[%s317] sm:$0xf]
      %v688 = vld [vmem:[%s317 + $0x4] sm:$0xf]
      %v689 = vld [vmem:[%s317 + $0x8] sm:$0xf]
      %v690 = vld [vmem:[%s317 + $0xc] sm:$0xf]
      %v691 = vld [vmem:[%s317 + $0x10] sm:$0xf]
      %v692 = vld [vmem:[%s317 + $0x14] sm:$0xf]
      %v693 = vld [vmem:[%s317 + $0x18] sm:$0xf]
      %v694 = vld [vmem:[%s317 + $0x1c] sm:$0xf]
      %v695 = vld [vmem:[%s317 + $0x20] sm:$0xf]
      %v696 = vld [vmem:[%s317 + $0x24] sm:$0xf]
      %v697 = vld [vmem:[%s317 + $0x28] sm:$0xf]
      %v698 = vld [vmem:[%s317 + $0x2c] sm:$0xf]
      %v699 = vld [vmem:[%s317 + $0x30] sm:$0xf]
      %v700 = vld [vmem:[%s317 + $0x34] sm:$0xf]
      %v701 = vld [vmem:[%s317 + $0x38] sm:$0xf]
      %v702 = vld [vmem:[%s317 + $0x3c] sm:$0xf]
      %v703 = vunpack.c.l.bf16 %v687
      %v704 = vunpack.c.l.bf16 %v688
      %v705 = vunpack.c.l.bf16 %v689
      %v706 = vunpack.c.l.bf16 %v690
      %v707 = vunpack.c.l.bf16 %v691
      %v708 = vunpack.c.l.bf16 %v692
      %v709 = vunpack.c.l.bf16 %v693
      %v710 = vunpack.c.l.bf16 %v694
      %v711 = vunpack.c.l.bf16 %v695
      %v712 = vunpack.c.l.bf16 %v696
      %v713 = vunpack.c.l.bf16 %v697
      %v714 = vunpack.c.l.bf16 %v698
      %v715 = vunpack.c.l.bf16 %v699
      %v716 = vunpack.c.l.bf16 %v700
      %v717 = vunpack.c.l.bf16 %v701
      %v718 = vunpack.c.l.bf16 %v702
      %v719 = vmul.f32 %v454, %v703
      %v720 = vmul.f32 %v455, %v704
      %v721 = vmul.f32 %v456, %v705
      %v722 = vmul.f32 %v457, %v706
      %v723 = vmul.f32 %v458, %v707
      %v724 = vmul.f32 %v459, %v708
      %v725 = vmul.f32 %v460, %v709
      %v726 = vmul.f32 %v461, %v710
      %v727 = vmul.f32 %v462, %v711
      %v728 = vmul.f32 %v463, %v712
      %v729 = vmul.f32 %v464, %v713
      %v730 = vmul.f32 %v465, %v714
      %v731 = vmul.f32 %v466, %v715
      %v732 = vmul.f32 %v467, %v716
      %v733 = vmul.f32 %v468, %v717
      %v734 = vmul.f32 %v469, %v718
      %735 = vadd.xlane.f32.xlu0 %v719
      %v736 = vpop.xlane.xlu0 %735
      %737 = vadd.xlane.f32.xlu0 %v720
      %v738 = vpop.xlane.xlu0 %737
      %739 = vadd.xlane.f32.xlu0 %v721
      %v740 = vpop.xlane.xlu0 %739
      %741 = vadd.xlane.f32.xlu0 %v722
      %v742 = vpop.xlane.xlu0 %741
      %743 = vadd.xlane.f32.xlu0 %v723
      %v744 = vpop.xlane.xlu0 %743
      %745 = vadd.xlane.f32.xlu0 %v724
      %v746 = vpop.xlane.xlu0 %745
      %747 = vadd.xlane.f32.xlu0 %v725
      %v748 = vpop.xlane.xlu0 %747
      %749 = vadd.xlane.f32.xlu0 %v726
      %v750 = vpop.xlane.xlu0 %749
      %751 = vadd.xlane.f32.xlu0 %v727
      %v752 = vpop.xlane.xlu0 %751
      %753 = vadd.xlane.f32.xlu0 %v728
      %v754 = vpop.xlane.xlu0 %753
      %755 = vadd.xlane.f32.xlu0 %v729
      %v756 = vpop.xlane.xlu0 %755
      %757 = vadd.xlane.f32.xlu0 %v730
      %v758 = vpop.xlane.xlu0 %757
      %759 = vadd.xlane.f32.xlu0 %v731
      %v760 = vpop.xlane.xlu0 %759
      %761 = vadd.xlane.f32.xlu0 %v732
      %v762 = vpop.xlane.xlu0 %761
      %763 = vadd.xlane.f32.xlu0 %v733
      %v764 = vpop.xlane.xlu0 %763
      %765 = vadd.xlane.f32.xlu0 %v734
      %v766 = vpop.xlane.xlu0 %765
      %v767 = vmax.f32 %v609, %v611
      %768 = vmax.xlane.f32.xlu0 %v767
      %v769 = vpop.xlane.xlu0 %768
      %v770 = vmax.f32 %v613, %v615
      %771 = vmax.xlane.f32.xlu0 %v770
      %v772 = vpop.xlane.xlu0 %771
      %v773 = vmax.f32 %v619, %v621
      %774 = vmax.xlane.f32.xlu0 %v773
      %v775 = vpop.xlane.xlu0 %774
      %v776 = vmax.f32 %v623, %v625
      %777 = vmax.xlane.f32.xlu0 %v776
      %v778 = vpop.xlane.xlu0 %777
      %v779 = vmax.f32 %v629, %v631
      %780 = vmax.xlane.f32.xlu0 %v779
      %v781 = vpop.xlane.xlu0 %780
      %v782 = vmax.f32 %v633, %v635
      %783 = vmax.xlane.f32.xlu0 %v782
      %v784 = vpop.xlane.xlu0 %783
      %v785 = vmax.f32 %v639, %v641
      %786 = vmax.xlane.f32.xlu0 %v785
      %v787 = vpop.xlane.xlu0 %786
      %v788 = vmax.f32 %v643, %v645
      %789 = vmax.xlane.f32.xlu0 %v788
      %v790 = vpop.xlane.xlu0 %789
      %v791 = vmax.f32 %v649, %v651
      %792 = vmax.xlane.f32.xlu0 %v791
      %v793 = vpop.xlane.xlu0 %792
      %v794 = vmax.f32 %v653, %v655
      %795 = vmax.xlane.f32.xlu0 %v794
      %v796 = vpop.xlane.xlu0 %795
      %v797 = vmax.f32 %v659, %v661
      %798 = vmax.xlane.f32.xlu0 %v797
      %v799 = vpop.xlane.xlu0 %798
      %v800 = vmax.f32 %v663, %v665
      %801 = vmax.xlane.f32.xlu0 %v800
      %v802 = vpop.xlane.xlu0 %801
      %v803 = vmax.f32 %v669, %v671
      %804 = vmax.xlane.f32.xlu0 %v803
      %v805 = vpop.xlane.xlu0 %804
      %v806 = vmax.f32 %v673, %v675
      %807 = vmax.xlane.f32.xlu0 %v806
      %v808 = vpop.xlane.xlu0 %807
      %v809 = vmax.f32 %v679, %v681
      %810 = vmax.xlane.f32.xlu0 %v809
      %v811 = vpop.xlane.xlu0 %810
      %v812 = vmax.f32 %v683, %v685
      %813 = vmax.xlane.f32.xlu0 %v812
      %v814 = vpop.xlane.xlu0 %813
      %v815 = vsub.f32 %v609, %v769
      %v816 = vsub.f32 %v611, %v769
      %v817 = vsub.f32 %v613, %v772
      %v818 = vsub.f32 %v615, %v772
      %v819 = vsub.f32 %v619, %v775
      %v820 = vsub.f32 %v621, %v775
      %v821 = vsub.f32 %v623, %v778
      %v822 = vsub.f32 %v625, %v778
      %v823 = vsub.f32 %v629, %v781
      %v824 = vsub.f32 %v631, %v781
      %v825 = vsub.f32 %v633, %v784
      %v826 = vsub.f32 %v635, %v784
      %v827 = vsub.f32 %v639, %v787
      %v828 = vsub.f32 %v641, %v787
      %v829 = vsub.f32 %v643, %v790
      %v830 = vsub.f32 %v645, %v790
      %v831 = vsub.f32 %v649, %v793
      %v832 = vsub.f32 %v651, %v793
      %v833 = vsub.f32 %v653, %v796
      %v834 = vsub.f32 %v655, %v796
      %v835 = vsub.f32 %v659, %v799
      %v836 = vsub.f32 %v661, %v799
      %v837 = vsub.f32 %v663, %v802
      %v838 = vsub.f32 %v665, %v802
      %v839 = vsub.f32 %v669, %v805
      %v840 = vsub.f32 %v671, %v805
      %v841 = vsub.f32 %v673, %v808
      %v842 = vsub.f32 %v675, %v808
      %v843 = vsub.f32 %v679, %v811
      %v844 = vsub.f32 %v681, %v811
      %v845 = vsub.f32 %v683, %v814
      %v846 = vsub.f32 %v685, %v814
      %v847 = vmul.f32 %v815, 1.442695
      %v848 = vpow.pop %v847
      %v849 = vmul.f32 %v816, 1.442695
      %v850 = vpow.pop %v849
      %v851 = vmul.f32 %v817, 1.442695
      %v852 = vpow.pop %v851
      %v853 = vmul.f32 %v818, 1.442695
      %v854 = vpow.pop %v853
      %v855 = vmul.f32 %v819, 1.442695
      %v856 = vpow.pop %v855
      %v857 = vmul.f32 %v820, 1.442695
      %v858 = vpow.pop %v857
      %v859 = vmul.f32 %v821, 1.442695
      %v860 = vpow.pop %v859
      %v861 = vmul.f32 %v822, 1.442695
      %v862 = vpow.pop %v861
      %v863 = vmul.f32 %v823, 1.442695
      %v864 = vpow.pop %v863
      %v865 = vmul.f32 %v824, 1.442695
      %v866 = vpow.pop %v865
      %v867 = vmul.f32 %v825, 1.442695
      %v868 = vpow.pop %v867
      %v869 = vmul.f32 %v826, 1.442695
      %v870 = vpow.pop %v869
      %v871 = vmul.f32 %v827, 1.442695
      %v872 = vpow.pop %v871
      %v873 = vmul.f32 %v828, 1.442695
      %v874 = vpow.pop %v873
      %v875 = vmul.f32 %v829, 1.442695
      %v876 = vpow.pop %v875
      %v877 = vmul.f32 %v830, 1.442695
      %v878 = vpow.pop %v877
      %v879 = vmul.f32 %v831, 1.442695
      %v880 = vpow.pop %v879
      %v881 = vmul.f32 %v832, 1.442695
      %v882 = vpow.pop %v881
      %v883 = vmul.f32 %v833, 1.442695
      %v884 = vpow.pop %v883
      %v885 = vmul.f32 %v834, 1.442695
      %v886 = vpow.pop %v885
      %v887 = vmul.f32 %v835, 1.442695
      %v888 = vpow.pop %v887
      %v889 = vmul.f32 %v836, 1.442695
      %v890 = vpow.pop %v889
      %v891 = vmul.f32 %v837, 1.442695
      %v892 = vpow.pop %v891
      %v893 = vmul.f32 %v838, 1.442695
      %v894 = vpow.pop %v893
      %v895 = vmul.f32 %v839, 1.442695
      %v896 = vpow.pop %v895
      %v897 = vmul.f32 %v840, 1.442695
      %v898 = vpow.pop %v897
      %v899 = vmul.f32 %v841, 1.442695
      %v900 = vpow.pop %v899
      %v901 = vmul.f32 %v842, 1.442695
      %v902 = vpow.pop %v901
      %v903 = vmul.f32 %v843, 1.442695
      %v904 = vpow.pop %v903
      %v905 = vmul.f32 %v844, 1.442695
      %v906 = vpow.pop %v905
      %v907 = vmul.f32 %v845, 1.442695
      %v908 = vpow.pop %v907
      %v909 = vmul.f32 %v846, 1.442695
      %v910 = vpow.pop %v909
      %v911 = vadd.f32 %v848, %v850
      %912 = vadd.xlane.f32.xlu0 %v911
      %v913 = vpop.xlane.xlu0 %912
      %v914 = vadd.f32 %v852, %v854
      %915 = vadd.xlane.f32.xlu0 %v914
      %v916 = vpop.xlane.xlu0 %915
      %v917 = vadd.f32 %v856, %v858
      %918 = vadd.xlane.f32.xlu0 %v917
      %v919 = vpop.xlane.xlu0 %918
      %v920 = vadd.f32 %v860, %v862
      %921 = vadd.xlane.f32.xlu0 %v920
      %v922 = vpop.xlane.xlu0 %921
      %v923 = vadd.f32 %v864, %v866
      %924 = vadd.xlane.f32.xlu0 %v923
      %v925 = vpop.xlane.xlu0 %924
      %v926 = vadd.f32 %v868, %v870
      %927 = vadd.xlane.f32.xlu0 %v926
      %v928 = vpop.xlane.xlu0 %927
      %v929 = vadd.f32 %v872, %v874
      %930 = vadd.xlane.f32.xlu0 %v929
      %v931 = vpop.xlane.xlu0 %930
      %v932 = vadd.f32 %v876, %v878
      %933 = vadd.xlane.f32.xlu0 %v932
      %v934 = vpop.xlane.xlu0 %933
      %v935 = vadd.f32 %v880, %v882
      %936 = vadd.xlane.f32.xlu0 %v935
      %v937 = vpop.xlane.xlu0 %936
      %v938 = vadd.f32 %v884, %v886
      %939 = vadd.xlane.f32.xlu0 %v938
      %v940 = vpop.xlane.xlu0 %939
      %v941 = vadd.f32 %v888, %v890
      %942 = vadd.xlane.f32.xlu0 %v941
      %v943 = vpop.xlane.xlu0 %942
      %v944 = vadd.f32 %v892, %v894
      %945 = vadd.xlane.f32.xlu0 %v944
      %v946 = vpop.xlane.xlu0 %945
      %v947 = vadd.f32 %v896, %v898
      %948 = vadd.xlane.f32.xlu0 %v947
      %v949 = vpop.xlane.xlu0 %948
      %v950 = vadd.f32 %v900, %v902
      %951 = vadd.xlane.f32.xlu0 %v950
      %v952 = vpop.xlane.xlu0 %951
      %v953 = vadd.f32 %v904, %v906
      %954 = vadd.xlane.f32.xlu0 %v953
      %v955 = vpop.xlane.xlu0 %954
      %v956 = vadd.f32 %v908, %v910
      %957 = vadd.xlane.f32.xlu0 %v956
      %v958 = vpop.xlane.xlu0 %957
      %v959 = vlog2.pop %v913
      %v960 = vmul.f32 %v959, 0.6931472
      %v961 = vlog2.pop %v916
      %v962 = vmul.f32 %v961, 0.6931472
      %v963 = vlog2.pop %v919
      %v964 = vmul.f32 %v963, 0.6931472
      %v965 = vlog2.pop %v922
      %v966 = vmul.f32 %v965, 0.6931472
      %v967 = vlog2.pop %v925
      %v968 = vmul.f32 %v967, 0.6931472
      %v969 = vlog2.pop %v928
      %v970 = vmul.f32 %v969, 0.6931472
      %v971 = vlog2.pop %v931
      %v972 = vmul.f32 %v971, 0.6931472
      %v973 = vlog2.pop %v934
      %v974 = vmul.f32 %v973, 0.6931472
      %v975 = vlog2.pop %v937
      %v976 = vmul.f32 %v975, 0.6931472
      %v977 = vlog2.pop %v940
      %v978 = vmul.f32 %v977, 0.6931472
      %v979 = vlog2.pop %v943
      %v980 = vmul.f32 %v979, 0.6931472
      %v981 = vlog2.pop %v946
      %v982 = vmul.f32 %v981, 0.6931472
      %v983 = vlog2.pop %v949
      %v984 = vmul.f32 %v983, 0.6931472
      %v985 = vlog2.pop %v952
      %v986 = vmul.f32 %v985, 0.6931472
      %v987 = vlog2.pop %v955
      %v988 = vmul.f32 %v987, 0.6931472
      %v989 = vlog2.pop %v958
      %v990 = vmul.f32 %v989, 0.6931472
      %v991 = vadd.f32 %v769, %v960
      %v992 = vadd.f32 %v772, %v962
      %v993 = vadd.f32 %v775, %v964
      %v994 = vadd.f32 %v778, %v966
      %v995 = vadd.f32 %v781, %v968
      %v996 = vadd.f32 %v784, %v970
      %v997 = vadd.f32 %v787, %v972
      %v998 = vadd.f32 %v790, %v974
      %v999 = vadd.f32 %v793, %v976
      %v1000 = vadd.f32 %v796, %v978
      %v1001 = vadd.f32 %v799, %v980
      %v1002 = vadd.f32 %v802, %v982
      %v1003 = vadd.f32 %v805, %v984
      %v1004 = vadd.f32 %v808, %v986
      %v1005 = vadd.f32 %v811, %v988
      %v1006 = vadd.f32 %v814, %v990
      %vm1007 = vcmask 7168
      %1008 = vst.msk [vmem:[%s323] sm:$0xff] %vm1007, %v991
      %1009 = vst.msk [vmem:[%s323 + $0x8] sm:$0xff] %vm1007, %v992
      %1010 = vst.msk [vmem:[%s323 + $0x10] sm:$0xff] %vm1007, %v993
      %1011 = vst.msk [vmem:[%s323 + $0x18] sm:$0xff] %vm1007, %v994
      %1012 = vst.msk [vmem:[%s323 + $0x20] sm:$0xff] %vm1007, %v995
      %1013 = vst.msk [vmem:[%s323 + $0x28] sm:$0xff] %vm1007, %v996
      %1014 = vst.msk [vmem:[%s323 + $0x30] sm:$0xff] %vm1007, %v997
      %1015 = vst.msk [vmem:[%s323 + $0x38] sm:$0xff] %vm1007, %v998
      %1016 = vst.msk [vmem:[%s323 + $0x40] sm:$0xff] %vm1007, %v999
      %1017 = vst.msk [vmem:[%s323 + $0x48] sm:$0xff] %vm1007, %v1000
      %1018 = vst.msk [vmem:[%s323 + $0x50] sm:$0xff] %vm1007, %v1001
      %1019 = vst.msk [vmem:[%s323 + $0x58] sm:$0xff] %vm1007, %v1002
      %1020 = vst.msk [vmem:[%s323 + $0x60] sm:$0xff] %vm1007, %v1003
      %1021 = vst.msk [vmem:[%s323 + $0x68] sm:$0xff] %vm1007, %v1004
      %1022 = vst.msk [vmem:[%s323 + $0x70] sm:$0xff] %vm1007, %v1005
      %1023 = vst.msk [vmem:[%s323 + $0x78] sm:$0xff] %vm1007, %v1006
      %1024 = vst.msk [vmem:[%s329] sm:$0xff] %vm1007, %v736
      %1025 = vst.msk [vmem:[%s329 + $0x8] sm:$0xff] %vm1007, %v738
      %1026 = vst.msk [vmem:[%s329 + $0x10] sm:$0xff] %vm1007, %v740
      %1027 = vst.msk [vmem:[%s329 + $0x18] sm:$0xff] %vm1007, %v742
      %1028 = vst.msk [vmem:[%s329 + $0x20] sm:$0xff] %vm1007, %v744
      %1029 = vst.msk [vmem:[%s329 + $0x28] sm:$0xff] %vm1007, %v746
      %1030 = vst.msk [vmem:[%s329 + $0x30] sm:$0xff] %vm1007, %v748
      %1031 = vst.msk [vmem:[%s329 + $0x38] sm:$0xff] %vm1007, %v750
      %1032 = vst.msk [vmem:[%s329 + $0x40] sm:$0xff] %vm1007, %v752
      %1033 = vst.msk [vmem:[%s329 + $0x48] sm:$0xff] %vm1007, %v754
      %1034 = vst.msk [vmem:[%s329 + $0x50] sm:$0xff] %vm1007, %v756
      %1035 = vst.msk [vmem:[%s329 + $0x58] sm:$0xff] %vm1007, %v758
      %1036 = vst.msk [vmem:[%s329 + $0x60] sm:$0xff] %vm1007, %v760
      %1037 = vst.msk [vmem:[%s329 + $0x68] sm:$0xff] %vm1007, %v762
      %1038 = vst.msk [vmem:[%s329 + $0x70] sm:$0xff] %vm1007, %v764
      %1039 = vst.msk [vmem:[%s329 + $0x78] sm:$0xff] %vm1007, %v766
      %v1040 = vmax.f32 %v609, %v619
      %v1041 = vmax.f32 %v613, %v623
      %v1042 = vmax.f32 %v1040, %v629
      %v1043 = vmax.f32 %v1041, %v633
      %v1044 = vmax.f32 %v1042, %v639
      %v1045 = vmax.f32 %v1043, %v643
      %v1046 = vmax.f32 %v1044, %v649
      %v1047 = vmax.f32 %v1045, %v653
      %v1048 = vmax.f32 %v1046, %v659
      %v1049 = vmax.f32 %v1047, %v663
      %v1050 = vmax.f32 %v1048, %v669
      %v1051 = vmax.f32 %v1049, %v673
      %v1052 = vmax.f32 %v1050, %v679
      %v1053 = vmax.f32 %v1051, %v683
      %v1054 = vmax.f32 %v1052, %v1053
      %v1055 = vrot.slane %v1054, 4
      %v1056 = vmax.f32 %v1054, %v1055
      %v1057 = vrot.slane %v1056, 2
      %v1058 = vmax.f32 %v1056, %v1057
      %v1059 = vrot.slane %v1058, 1
      %v1060 = vmax.f32 %v1058, %v1059
      %v1061 = vmax.f32 %v611, %v621
      %v1062 = vmax.f32 %v615, %v625
      %v1063 = vmax.f32 %v1061, %v631
      %v1064 = vmax.f32 %v1062, %v635
      %v1065 = vmax.f32 %v1063, %v641
      %v1066 = vmax.f32 %v1064, %v645
      %v1067 = vmax.f32 %v1065, %v651
      %v1068 = vmax.f32 %v1066, %v655
      %v1069 = vmax.f32 %v1067, %v661
      %v1070 = vmax.f32 %v1068, %v665
      %v1071 = vmax.f32 %v1069, %v671
      %v1072 = vmax.f32 %v1070, %v675
      %v1073 = vmax.f32 %v1071, %v681
      %v1074 = vmax.f32 %v1072, %v685
      %v1075 = vmax.f32 %v1073, %v1074
      %v1076 = vrot.slane %v1075, 4
      %v1077 = vmax.f32 %v1075, %v1076
      %v1078 = vrot.slane %v1077, 2
      %v1079 = vmax.f32 %v1077, %v1078
      %v1080 = vrot.slane %v1079, 1
      %v1081 = vmax.f32 %v1079, %v1080
      %v1082 = vsub.f32 %v609, %v1060
      %v1083 = vsub.f32 %v611, %v1081
      %v1084 = vsub.f32 %v613, %v1060
      %v1085 = vsub.f32 %v615, %v1081
      %v1086 = vsub.f32 %v619, %v1060
      %v1087 = vsub.f32 %v621, %v1081
      %v1088 = vsub.f32 %v623, %v1060
      %v1089 = vsub.f32 %v625, %v1081
      %v1090 = vsub.f32 %v629, %v1060
      %v1091 = vsub.f32 %v631, %v1081
      %v1092 = vsub.f32 %v633, %v1060
      %v1093 = vsub.f32 %v635, %v1081
      %v1094 = vsub.f32 %v639, %v1060
      %v1095 = vsub.f32 %v641, %v1081
      %v1096 = vsub.f32 %v643, %v1060
      %v1097 = vsub.f32 %v645, %v1081
      %v1098 = vsub.f32 %v649, %v1060
      %v1099 = vsub.f32 %v651, %v1081
      %v1100 = vsub.f32 %v653, %v1060
      %v1101 = vsub.f32 %v655, %v1081
      %v1102 = vsub.f32 %v659, %v1060
      %v1103 = vsub.f32 %v661, %v1081
      %v1104 = vsub.f32 %v663, %v1060
      %v1105 = vsub.f32 %v665, %v1081
      %v1106 = vsub.f32 %v669, %v1060
      %v1107 = vsub.f32 %v671, %v1081
      %v1108 = vsub.f32 %v673, %v1060
      %v1109 = vsub.f32 %v675, %v1081
      %v1110 = vsub.f32 %v679, %v1060
      %v1111 = vsub.f32 %v681, %v1081
      %v1112 = vsub.f32 %v683, %v1060
      %v1113 = vsub.f32 %v685, %v1081
      %v1114 = vmul.f32 %v1082, 1.442695
      %v1115 = vpow.pop %v1114
      %v1116 = vmul.f32 %v1083, 1.442695
      %v1117 = vpow.pop %v1116
      %v1118 = vmul.f32 %v1084, 1.442695
      %v1119 = vpow.pop %v1118
      %v1120 = vmul.f32 %v1085, 1.442695
      %v1121 = vpow.pop %v1120
      %v1122 = vmul.f32 %v1086, 1.442695
      %v1123 = vpow.pop %v1122
      %v1124 = vmul.f32 %v1087, 1.442695
      %v1125 = vpow.pop %v1124
      %v1126 = vmul.f32 %v1088, 1.442695
      %v1127 = vpow.pop %v1126
      %v1128 = vmul.f32 %v1089, 1.442695
      %v1129 = vpow.pop %v1128
      %v1130 = vmul.f32 %v1090, 1.442695
      %v1131 = vpow.pop %v1130
      %v1132 = vmul.f32 %v1091, 1.442695
      %v1133 = vpow.pop %v1132
      %v1134 = vmul.f32 %v1092, 1.442695
      %v1135 = vpow.pop %v1134
      %v1136 = vmul.f32 %v1093, 1.442695
      %v1137 = vpow.pop %v1136
      %v1138 = vmul.f32 %v1094, 1.442695
      %v1139 = vpow.pop %v1138
      %v1140 = vmul.f32 %v1095, 1.442695
      %v1141 = vpow.pop %v1140
      %v1142 = vmul.f32 %v1096, 1.442695
      %v1143 = vpow.pop %v1142
      %v1144 = vmul.f32 %v1097, 1.442695
      %v1145 = vpow.pop %v1144
      %v1146 = vmul.f32 %v1098, 1.442695
      %v1147 = vpow.pop %v1146
      %v1148 = vmul.f32 %v1099, 1.442695
      %v1149 = vpow.pop %v1148
      %v1150 = vmul.f32 %v1100, 1.442695
      %v1151 = vpow.pop %v1150
      %v1152 = vmul.f32 %v1101, 1.442695
      %v1153 = vpow.pop %v1152
      %v1154 = vmul.f32 %v1102, 1.442695
      %v1155 = vpow.pop %v1154
      %v1156 = vmul.f32 %v1103, 1.442695
      %v1157 = vpow.pop %v1156
      %v1158 = vmul.f32 %v1104, 1.442695
      %v1159 = vpow.pop %v1158
      %v1160 = vmul.f32 %v1105, 1.442695
      %v1161 = vpow.pop %v1160
      %v1162 = vmul.f32 %v1106, 1.442695
      %v1163 = vpow.pop %v1162
      %v1164 = vmul.f32 %v1107, 1.442695
      %v1165 = vpow.pop %v1164
      %v1166 = vmul.f32 %v1108, 1.442695
      %v1167 = vpow.pop %v1166
      %v1168 = vmul.f32 %v1109, 1.442695
      %v1169 = vpow.pop %v1168
      %v1170 = vmul.f32 %v1110, 1.442695
      %v1171 = vpow.pop %v1170
      %v1172 = vmul.f32 %v1111, 1.442695
      %v1173 = vpow.pop %v1172
      %v1174 = vmul.f32 %v1112, 1.442695
      %v1175 = vpow.pop %v1174
      %v1176 = vmul.f32 %v1113, 1.442695
      %v1177 = vpow.pop %v1176
      %v1178 = vadd.f32 %v1115, %v1119
      %v1179 = vadd.f32 %v1178, %v1123
      %v1180 = vadd.f32 %v1179, %v1127
      %v1181 = vadd.f32 %v1180, %v1131
      %v1182 = vadd.f32 %v1181, %v1135
      %v1183 = vadd.f32 %v1182, %v1139
      %v1184 = vadd.f32 %v1183, %v1143
      %v1185 = vadd.f32 %v1184, %v1147
      %v1186 = vadd.f32 %v1185, %v1151
      %v1187 = vadd.f32 %v1186, %v1155
      %v1188 = vadd.f32 %v1187, %v1159
      %v1189 = vadd.f32 %v1188, %v1163
      %v1190 = vadd.f32 %v1189, %v1167
      %v1191 = vadd.f32 %v1190, %v1171
      %v1192 = vadd.f32 %v1191, %v1175
      %v1193 = vrot.slane %v1192, 4
      %v1194 = vadd.f32 %v1192, %v1193
      %v1195 = vrot.slane %v1194, 2
      %v1196 = vadd.f32 %v1194, %v1195
      %v1197 = vrot.slane %v1196, 1
      %v1198 = vadd.f32 %v1196, %v1197
      %v1199 = vadd.f32 %v1117, %v1121
      %v1200 = vadd.f32 %v1199, %v1125
      %v1201 = vadd.f32 %v1200, %v1129
      %v1202 = vadd.f32 %v1201, %v1133
      %v1203 = vadd.f32 %v1202, %v1137
      %v1204 = vadd.f32 %v1203, %v1141
      %v1205 = vadd.f32 %v1204, %v1145
      %v1206 = vadd.f32 %v1205, %v1149
      %v1207 = vadd.f32 %v1206, %v1153
      %v1208 = vadd.f32 %v1207, %v1157
      %v1209 = vadd.f32 %v1208, %v1161
      %v1210 = vadd.f32 %v1209, %v1165
      %v1211 = vadd.f32 %v1210, %v1169
      %v1212 = vadd.f32 %v1211, %v1173
      %v1213 = vadd.f32 %v1212, %v1177
      %v1214 = vrot.slane %v1213, 4
      %v1215 = vadd.f32 %v1213, %v1214
      %v1216 = vrot.slane %v1215, 2
      %v1217 = vadd.f32 %v1215, %v1216
      %v1218 = vrot.slane %v1217, 1
      %v1219 = vadd.f32 %v1217, %v1218
      %v1222 = vcombine.low %v1060, %v1081
      %v1224 = vunpack.c.l.s4 1966171168
      %v1225 = vunpack.c.0.s8 %v1224
      %v1226 = vlaneseq
      %v1227 = vshrl.u32 %v1226, 7
      %v1228 = vsub.s32 %v1225, %v1227
      %v1229 = vrot.slane %v1222, %v1228
      %v1231 = vunpack.c.l.s4 1966171168
      %v1232 = vunpack.c.0.s8 %v1231
      %v1233 = vlaneseq
      %v1234 = vshrl.u32 %v1233, 7
      %v1235 = vsub.s32 %v1232, %v1234
      %v1236 = vrot.slane %v1229, %v1235
      %v1238 = vlaneseq
      %vm1239 = vcmp.ge.s32.totalorder %v1238, 0
      %vm1240 = vcmp.lt.s32.totalorder %v1238, 256
      %vm1241 = vmand %vm1239, %vm1240
      %1242 = vst.msk [vmem:[%s334] sm:$0x3] %vm1241, %v1236
      %v1245 = vcombine.low %v1198, %v1219
      %v1247 = vunpack.c.l.s4 1966171168
      %v1248 = vunpack.c.0.s8 %v1247
      %v1249 = vlaneseq
      %v1250 = vshrl.u32 %v1249, 7
      %v1251 = vsub.s32 %v1248, %v1250
      %v1252 = vrot.slane %v1245, %v1251
      %v1254 = vunpack.c.l.s4 1966171168
      %v1255 = vunpack.c.0.s8 %v1254
      %v1256 = vlaneseq
      %v1257 = vshrl.u32 %v1256, 7
      %v1258 = vsub.s32 %v1255, %v1257
      %v1259 = vrot.slane %v1252, %v1258
      %1261 = vst.msk [vmem:[%s338] sm:$0x3] %vm1241, %v1259
      %s1262 = smul.u32 16, %s20
      %p1263 = scmp.lt.s32.totalorder %s1262, 31
      %s1264 = scalar_select %p1263, %s1262, 31
      %s1265 = smul.addr %s1264, 8
      %s1266 = scalar_lea.vmem %s4, %s1265
      %s1267 = smul.u32 16, %s20
      %p1268 = scmp.lt.s32.totalorder %s1267, 31
      %s1269 = scalar_select %p1268, %s1267, 31
      %s1270 = smul.addr %s1269, 8
      %s1271 = scalar_lea.vmem %s5, %s1270
      %p1272 = scmp.lt.s32.totalorder %s20, 1
      %s1273 = scalar_select %p1272, %s20, 1
      %s1274 = smul.addr %s1273, 2
      %s1275 = scalar_lea.vmem %s6, %s1274
      %p1276 = scmp.lt.s32.totalorder %s20, 1
      %s1277 = scalar_select %p1276, %s20, 1
      %s1278 = smul.addr %s1277, 2
      %s1279 = scalar_lea.vmem %s7, %s1278
      // Predicated region
      $region37: #{clip_loss.1} parent=35 // pred_check
        %p1280 = pneg %p132
      $region38: #{clip_loss.1} parent=35 // pred_check_branch
        %1282 = sbr.rel (%p1280) target = $region40
      $region39: #{clip_loss.1} parent=35 // pred_region
        %s1283 = smul.u32 16, %s20
      $region40: #{clip_loss.1} parent=35 // pred_fallthru
        _
      // Predicated region
      $region41: #{clip_loss.1} parent=35 // pred_check
        %p1284 = pneg %p158
      $region42: #{clip_loss.1} parent=35 // pred_check_branch
        %1286 = sbr.rel (%p1284) target = $region44
      $region43: #{clip_loss.1} parent=35 // pred_region
        %s1287 = smul.u32 16, %s20
      $region44: #{clip_loss.1} parent=35 // pred_fallthru
        _
      // Predicated region
      $region45: #{clip_loss.1} parent=35 // pred_check
        %p1288 = pneg %p184
      $region46: #{clip_loss.1} parent=35 // pred_check_branch
        %1290 = sbr.rel (%p1288) target = $region48
      $region47: #{clip_loss.1} parent=35 // pred_region
        _
      $region48: #{clip_loss.1} parent=35 // pred_fallthru
        _
      // Predicated region
      $region49: #{clip_loss.1} parent=35 // pred_check
        %p1291 = pneg %p210
      $region50: #{clip_loss.1} parent=35 // pred_check_branch
        %1293 = sbr.rel (%p1291) target = $region52
      $region51: #{clip_loss.1} parent=35 // pred_region
        _
      $region52: #{clip_loss.1} parent=35 // pred_fallthru
        _
    $region36: #{clip_loss.1} parent=5 // pred_fallthru
      _
    %p1294 = scmp.le.s32.totalorder 2, %s15
    // Predicated region
    $region53: #{clip_loss.1} parent=5 // pred_check
      %p1295 = pneg %p1294
    $region54: #{clip_loss.1} parent=5 // pred_check_branch
      %1297 = sbr.rel (%p1295) target = $region56
    $region55: #{clip_loss.1} parent=5 // pred_region
      %s1298 = ssub.s32 %s15, 2
      // Predicated region
      $region57: #{clip_loss.1} parent=55 // pred_check
        %p1299 = pneg %p138
      $region58: #{clip_loss.1} parent=55 // pred_check_branch
        %1301 = sbr.rel (%p1299) target = $region60
      $region59: #{clip_loss.1} parent=55 // pred_region
        %s1302 = smul.u32 16, %s21
        %p1303 = scmp.lt.s32.totalorder %s1302, 31
        %s1304 = scalar_select %p1303, %s1302, 31
        %s1305 = smul.addr %s1304, 8
        %s1306 = scalar_lea.vmem %s4, %s1305
      $region60: #{clip_loss.1} parent=55 // pred_fallthru
        _
      // Predicated region
      $region61: #{clip_loss.1} parent=55 // pred_check
        %p1307 = pneg %p164
      $region62: #{clip_loss.1} parent=55 // pred_check_branch
        %1309 = sbr.rel (%p1307) target = $region64
      $region63: #{clip_loss.1} parent=55 // pred_region
        %s1310 = smul.u32 16, %s21
        %p1311 = scmp.lt.s32.totalorder %s1310, 31
        %s1312 = scalar_select %p1311, %s1310, 31
        %s1313 = smul.addr %s1312, 8
        %s1314 = scalar_lea.vmem %s5, %s1313
      $region64: #{clip_loss.1} parent=55 // pred_fallthru
        _
      // Predicated region
      $region65: #{clip_loss.1} parent=55 // pred_check
        %p1315 = pneg %p190
      $region66: #{clip_loss.1} parent=55 // pred_check_branch
        %1317 = sbr.rel (%p1315) target = $region68
      $region67: #{clip_loss.1} parent=55 // pred_region
        %p1318 = scmp.lt.s32.totalorder %s21, 1
        %s1319 = scalar_select %p1318, %s21, 1
        %s1320 = smul.addr %s1319, 2
        %s1321 = scalar_lea.vmem %s6, %s1320
      $region68: #{clip_loss.1} parent=55 // pred_fallthru
        _
      // Predicated region
      $region69: #{clip_loss.1} parent=55 // pred_check
        %p1322 = pneg %p216
      $region70: #{clip_loss.1} parent=55 // pred_check_branch
        %1324 = sbr.rel (%p1322) target = $region72
      $region71: #{clip_loss.1} parent=55 // pred_region
        %p1325 = scmp.lt.s32.totalorder %s21, 1
        %s1326 = scalar_select %p1325, %s21, 1
        %s1327 = smul.addr %s1326, 2
        %s1328 = scalar_lea.vmem %s7, %s1327
      $region72: #{clip_loss.1} parent=55 // pred_fallthru
        _
    $region56: #{clip_loss.1} parent=5 // pred_fallthru
      _
  $region6: #{clip_loss.1} parent=0 // loop_footer
    %s19 = sadd.s32 1, %s15
  $region7: #{clip_loss.1} parent=0 // loop_footer_branch
    %14 = sbr.rel target = $region3
  $region8: #{clip_loss.1} parent=0 // loop_exit
    _

</llo_original>
